<compile_context>
chip_gen: v7x
topology: tpu7x:2x2x1
jax: 0.10.0
libtpu: 0.0.40
codegen_flags: <defaults>
</compile_context>

<pallas_src>
import functools

import jax
import jax.numpy as jnp
from jax.experimental import pallas as pl
from jax.experimental.pallas import tpu as pltpu


def _binary_head_kernel(x_ref, w_ref, b_ref, o_ref, *, eps):
    # x_ref: (TB, E)  w_ref: (E, Cp)  b_ref: (1, Cp)  o_ref: (TB, Cp)
    x = x_ref[...]                                        # f32
    # ||x||^2 per row; clamp at eps^2 so rsqrt(max(nsq, eps^2)) == 1/max(||x||, eps)
    norm_sq = jnp.sum(x * x, axis=1, keepdims=True)       # (TB, 1)
    inv_norm = jax.lax.rsqrt(jnp.maximum(norm_sq, eps * eps))
    # raw = x @ (W^T * scale); then scale-by-inv-norm on the small (TB, Cp) tile.
    raw = jnp.dot(x, w_ref[...], preferred_element_type=jnp.float32)
    o_ref[...] = (raw * inv_norm + b_ref[...]).astype(o_ref.dtype)


def binary_head(x, weight, bias, scale=1.0, eps=1e-12, tile_b=1024):
    """x: (B, E) f32. weight: (C, E) (PyTorch Linear layout). bias: (C,)."""
    B, E = x.shape
    C = weight.shape[0]

    # --- wrapper-side layout plumbing (done once at trace time) -------------
    # Fold scale into weight & bias; transpose weight; pad class dim to 128.
    C_pad = max(128, ((C + 127) // 128) * 128)
    w_t = (weight.T * scale).astype(jnp.float32)                      # (E, C)
    w_p = jnp.zeros((E, C_pad), jnp.float32).at[:, :C].set(w_t)       # (E, Cp)
    b_p = jnp.zeros((1, C_pad), jnp.float32).at[0, :C].set(
        bias.astype(jnp.float32) * scale)                             # (1, Cp)

    # Pad B to a multiple of the batch tile (tile is a multiple of 8).
    B8 = ((B + 7) // 8) * 8
    TB = min(int(tile_b), B8)
    B_pad = ((B + TB - 1) // TB) * TB
    if B_pad != B:
        x_p = jnp.zeros((B_pad, E), jnp.float32).at[:B].set(x)
    else:
        x_p = x

    grid = (B_pad // TB,)

    # VMEM need: W + bias (resident) + 2x double-buffered x tile + 2x out tile.
    vmem_need = (E * C_pad + C_pad) * 4 + 2 * (TB * E) * 4 + 2 * (TB * C_pad) * 4
    vmem_limit = min(max(vmem_need * 2, 4 << 20), 48 << 20)

    kernel = functools.partial(_binary_head_kernel, eps=eps)
    out = pl.pallas_call(
        kernel,
        out_shape=jax.ShapeDtypeStruct((B_pad, C_pad), jnp.float32),
        grid_spec=pltpu.PrefetchScalarGridSpec(
            num_scalar_prefetch=0,
            grid=grid,
            in_specs=[
                pl.BlockSpec((TB, E), lambda i: (i, 0)),      # x tiles stream
                pl.BlockSpec((E, C_pad), lambda i: (0, 0)),   # W resident
                pl.BlockSpec((1, C_pad), lambda i: (0, 0)),   # bias resident
            ],
            out_specs=pl.BlockSpec((TB, C_pad), lambda i: (i, 0)),
        ),
        compiler_params=pltpu.CompilerParams(
            dimension_semantics=("parallel",),
            vmem_limit_bytes=int(vmem_limit),
        ),
    )(x_p, w_p, b_p)

    return out[:B, :C]


def binary_head_ref(x, weight, bias, scale=1.0, eps=1e-12):
    norm = jnp.sqrt(jnp.sum(x * x, axis=1, keepdims=True))
    x_n = x / jnp.maximum(norm, eps)
    return (x_n @ weight.T + bias) * scale


if __name__ == "__main__":
    key = jax.random.PRNGKey(0)
    B, E, C = 8, 256, 4          # small shapes consistent with the module

    kx, kw, kb = jax.random.split(key, 3)
    x = jax.random.normal(kx, (B, E), dtype=jnp.float32)
    # Deterministic Linear-style init (uniform in +/- 1/sqrt(E)), like nn.Linear
    bound = 1.0 / (E ** 0.5)
    weight = jax.random.uniform(kw, (C, E), minval=-bound, maxval=bound,
                                dtype=jnp.float32)
    bias = jax.random.uniform(kb, (C,), minval=-bound, maxval=bound,
                              dtype=jnp.float32)

    ok = True
    for scale in (1.0, 2.0):     # also exercises the scale-folding path
        out = binary_head(x, weight, bias, scale=scale)
        out = jax.block_until_ready(out)
        ref = binary_head_ref(x, weight, bias, scale=scale)
        ok &= out.shape == (B, C)
        ok &= bool(jnp.allclose(out, ref, atol=1e-5, rtol=1e-5))

    assert ok, "mismatch vs reference"
    print("KERNEL_OK")
</pallas_src>

<mosaic_0001>
module attributes {stable_mosaic.version = 11 : i64} {
  func.func @_binary_head_kernel(%arg0: i32, %arg1: memref<8x256xf32, #tpu.memory_space<vmem>>, %arg2: memref<256x128xf32, #tpu.memory_space<vmem>>, %arg3: memref<1x128xf32, #tpu.memory_space<vmem>>, %arg4: memref<8x128xf32, #tpu.memory_space<vmem>>) attributes {dimension_semantics = [#tpu.dimension_semantics<parallel>], iteration_bounds = array<i64: 1>, scalar_prefetch = 0 : i64, scratch_operands = 0 : i64, tpu.core_type = #tpu.core_type<tc>, window_params = [{transform_indices = @transform_0, window_bounds = array<i64: 8, 256>}, {pipeline_mode = #tpu.pipeline_mode<synchronous>, transform_indices = @transform_1, window_bounds = array<i64: 256, 128>}, {pipeline_mode = #tpu.pipeline_mode<synchronous>, transform_indices = @transform_2, window_bounds = array<i64: 1, 128>}, {transform_indices = @transform_3, window_bounds = array<i64: 8, 128>}]} {
    %c0 = arith.constant 0 : index
    %c0_0 = arith.constant 0 : index
    %0 = vector.load %arg1[%c0, %c0_0] : memref<8x256xf32, #tpu.memory_space<vmem>>, vector<8x256xf32>
    %1 = arith.mulf %0, %0 : vector<8x256xf32>
    %cst = arith.constant dense<0.000000e+00> : vector<8xf32>
    %2 = vector.multi_reduction <add>, %1, %cst [1] : vector<8x256xf32> to vector<8xf32>
    %3 = vector.shape_cast %2 : vector<8xf32> to vector<8x1xf32>
    %cst_1 = arith.constant 1.000000e-24 : f32
    %4 = vector.broadcast %cst_1 : f32 to vector<8x1xf32>
    %5 = arith.maximumf %3, %4 : vector<8x1xf32>
    %6 = math.rsqrt %5 : vector<8x1xf32>
    %c0_2 = arith.constant 0 : index
    %c0_3 = arith.constant 0 : index
    %7 = vector.load %arg2[%c0_2, %c0_3] : memref<256x128xf32, #tpu.memory_space<vmem>>, vector<256x128xf32>
    %cst_4 = arith.constant dense<0.000000e+00> : vector<8x128xf32>
    %8 = tpu.matmul %0, %7, %cst_4 {dimension_numbers = #tpu.dot_dimension_numbers<[1], [0], [0], [1], [0, 0, 1, 1], [], []>} : vector<8x256xf32>, vector<256x128xf32>, vector<8x128xf32> -> vector<8x128xf32>
    %9 = vector.broadcast %6 : vector<8x1xf32> to vector<8x128xf32>
    %10 = arith.mulf %8, %9 : vector<8x128xf32>
    %c0_5 = arith.constant 0 : index
    %c0_6 = arith.constant 0 : index
    %11 = vector.load %arg3[%c0_5, %c0_6] : memref<1x128xf32, #tpu.memory_space<vmem>>, vector<1x128xf32>
    %12 = vector.broadcast %11 : vector<1x128xf32> to vector<8x128xf32>
    %13 = arith.addf %10, %12 : vector<8x128xf32>
    %c0_7 = arith.constant 0 : index
    %c0_8 = arith.constant 0 : index
    %14 = vector.load %arg4[%c0_7, %c0_8] : memref<8x128xf32, #tpu.memory_space<vmem>>, vector<8x128xf32>
    tpu.vector_store %arg4[%c0_7, %c0_8], %13 {strides = array<i32>} : memref<8x128xf32, #tpu.memory_space<vmem>>, vector<8x128xf32>,
    return
  }
  func.func @transform_0(%arg0: i32) -> (i32, i32) {
    %c0_i32 = arith.constant 0 : i32
    %c0_i32_0 = arith.constant 0 : i32
    return %arg0, %c0_i32 : i32, i32
  }
  func.func @transform_1(%arg0: i32) -> (i32, i32) {
    %c0_i32 = arith.constant 0 : i32
    %c0_i32_0 = arith.constant 0 : i32
    %c0_i32_1 = arith.constant 0 : i32
    return %c0_i32, %c0_i32_0 : i32, i32
  }
  func.func @transform_2(%arg0: i32) -> (i32, i32) {
    %c0_i32 = arith.constant 0 : i32
    %c0_i32_0 = arith.constant 0 : i32
    %c0_i32_1 = arith.constant 0 : i32
    return %c0_i32, %c0_i32_0 : i32, i32
  }
  func.func @transform_3(%arg0: i32) -> (i32, i32) {
    %c0_i32 = arith.constant 0 : i32
    %c0_i32_0 = arith.constant 0 : i32
    return %arg0, %c0_i32 : i32, i32
  }
}

</mosaic_0001>

<llo_original>
// kernel: tpu_custom_call.1
$region0: #{tpu_custom_call.1}
  #allocation0 [shape = 'u32[]', space=smem, size = 0x4, offset = 0x4, fixed_abs, tag = 'smem constant byte address 0x4 - core index']
  #allocation1 [shape = 'u32[144,128]{1,0:T(1,128)}', space=vmem, size = 0x12000, scoped, tag = 'internal scratch']
  %s0 = inlined_call_operand.hbm [shape: f32[8,256], index: 0, kind: input, shape index: {}]
  %s1 = inlined_call_operand.hbm [shape: f32[256,128], index: 1, kind: input, shape index: {}]
  %s2 = inlined_call_operand.vmem [shape: f32[1,128], index: 2, kind: input, shape index: {}]
  %s3 = inlined_call_operand.hbm [shape: f32[8,128], index: 3, kind: output, shape index: {}]
  %s4 = sld [smem:[#allocation0]]
  $region30: #{tpu_custom_call.1} parent=0
    _
  %s6 = ssub.s32 1, %s4
  %s7 = scalar_select 0, %s6, %s4
  $region1: #{tpu_custom_call.1} parent=0
    #allocation2 [shape = 'u8[8192]{0}', space=vmem, size = 0x2000, scoped, tag = 'input window, operand 0, single buffered']
    #allocation3 [shape = 's32[1]{0}', space=sflag, size = 0x4, scoped, tag = 'scoped memory for tpu_custom_call.1']
    #allocation4 [shape = 's32[1]{0}', space=sflag, size = 0x4, scoped, tag = 'scoped memory for tpu_custom_call.1']
    #allocation5 [shape = 'u8[131072]{0}', space=vmem, size = 0x20000, scoped, tag = 'input window, operand 1, single buffered']
    #allocation6 [shape = 's32[1]{0}', space=sflag, size = 0x4, scoped, tag = 'scoped memory for tpu_custom_call.1']
    #allocation7 [shape = 'u8[4096]{0}', space=vmem, size = 0x1000, scoped, tag = 'output window, operand 0, single buffered']
    %8 = vsyncpa [#allocation3], 0
    %9 = vsyncpa [#allocation6], 0
    %10 = vsyncpa [#allocation4], 0
    // Predicated region
    $region2: #{tpu_custom_call.1} parent=1 // pred_check
      _
    $region3: #{tpu_custom_call.1} parent=1 // pred_check_branch
      %12 = sbr.rel (0) target = $region5
    $region4: #{tpu_custom_call.1} parent=1 // pred_region
      %s14 = ssub.s32 256, 256
      %15 = vsyncadd [#allocation3], %s14
      %s17 = sshll.u32 [#allocation2], 4
      %s18 = int_to_ptr.vmem [resolvable:$true] %s17
      %20 = dma.hbm_to_vmem [thread:$0]  %s0, 256, %s18, [#allocation3]
    $region5: #{tpu_custom_call.1} parent=1 // pred_fallthru
      _
    // Predicated region
    $region6: #{tpu_custom_call.1} parent=1 // pred_check
      _
    $region7: #{tpu_custom_call.1} parent=1 // pred_check_branch
      %22 = sbr.rel (0) target = $region9
    $region8: #{tpu_custom_call.1} parent=1 // pred_region
      %s24 = ssub.s32 4096, 4096
      %25 = vsyncadd [#allocation6], %s24
      %s26 = sshll.u32 [#allocation5], 4
      %s27 = int_to_ptr.vmem [resolvable:$true] %s26
      %32 = dma.hbm_to_vmem [thread:$0]  %s1, 4096, %s27, [#allocation6], 128, 128, 8
    $region9: #{tpu_custom_call.1} parent=1 // pred_fallthru
      _
    // Predicated region
    $region10: #{tpu_custom_call.1} parent=1 // pred_check
      _
    $region11: #{tpu_custom_call.1} parent=1 // pred_check_branch
      %34 = sbr.rel (0) target = $region13
    $region12: #{tpu_custom_call.1} parent=1 // pred_region
      _
    $region13: #{tpu_custom_call.1} parent=1 // pred_fallthru
      _
    // Predicated region
    $region14: #{tpu_custom_call.1} parent=1 // pred_check
      _
    $region15: #{tpu_custom_call.1} parent=1 // pred_check_branch
      %36 = sbr.rel (0) target = $region17
    $region16: #{tpu_custom_call.1} parent=1 // pred_region
      %37 = dma.done [#allocation3], 256
    $region17: #{tpu_custom_call.1} parent=1 // pred_fallthru
      _
    // Predicated region
    $region18: #{tpu_custom_call.1} parent=1 // pred_check
      _
    $region19: #{tpu_custom_call.1} parent=1 // pred_check_branch
      %39 = sbr.rel (0) target = $region21
    $region20: #{tpu_custom_call.1} parent=1 // pred_region
      %40 = dma.done [#allocation6], 4096
    $region21: #{tpu_custom_call.1} parent=1 // pred_fallthru
      _
    %v41 = vld [vmem:[#allocation2] sm:$0xff]
    %v42 = vld [vmem:[#allocation2 + $0x8] sm:$0xff]
    %v43 = vmul.f32 %v41, %v41
    %v44 = vmul.f32 %v42, %v42
    %v45 = vadd.f32 %v43, %v44
    %46 = vadd.xlane.f32.xlu0 %v45
    %v47 = vpop.xlane.xlu0 %46
    %v48 = vmax.f32 %v47, 1e-24
    %v49 = vrsqrt.pop %v48
    %v50 = vld [vmem:[#allocation5] sm:$0xff]
    %v51 = vld [vmem:[#allocation5 + $0x8] sm:$0xff]
    %v52 = vld [vmem:[#allocation5 + $0x10] sm:$0xff]
    %v53 = vld [vmem:[#allocation5 + $0x18] sm:$0xff]
    %v54 = vld [vmem:[#allocation5 + $0x20] sm:$0xff]
    %v55 = vld [vmem:[#allocation5 + $0x28] sm:$0xff]
    %v56 = vld [vmem:[#allocation5 + $0x30] sm:$0xff]
    %v57 = vld [vmem:[#allocation5 + $0x38] sm:$0xff]
    %v58 = vld [vmem:[#allocation5 + $0x40] sm:$0xff]
    %v59 = vld [vmem:[#allocation5 + $0x48] sm:$0xff]
    %v60 = vld [vmem:[#allocation5 + $0x50] sm:$0xff]
    %v61 = vld [vmem:[#allocation5 + $0x58] sm:$0xff]
    %v62 = vld [vmem:[#allocation5 + $0x60] sm:$0xff]
    %v63 = vld [vmem:[#allocation5 + $0x68] sm:$0xff]
    %v64 = vld [vmem:[#allocation5 + $0x70] sm:$0xff]
    %v65 = vld [vmem:[#allocation5 + $0x78] sm:$0xff]
    %v66 = vld [vmem:[#allocation5 + $0x80] sm:$0xff]
    %v67 = vld [vmem:[#allocation5 + $0x88] sm:$0xff]
    %v68 = vld [vmem:[#allocation5 + $0x90] sm:$0xff]
    %v69 = vld [vmem:[#allocation5 + $0x98] sm:$0xff]
    %v70 = vld [vmem:[#allocation5 + $0xa0] sm:$0xff]
    %v71 = vld [vmem:[#allocation5 + $0xa8] sm:$0xff]
    %v72 = vld [vmem:[#allocation5 + $0xb0] sm:$0xff]
    %v73 = vld [vmem:[#allocation5 + $0xb8] sm:$0xff]
    %v74 = vld [vmem:[#allocation5 + $0xc0] sm:$0xff]
    %v75 = vld [vmem:[#allocation5 + $0xc8] sm:$0xff]
    %v76 = vld [vmem:[#allocation5 + $0xd0] sm:$0xff]
    %v77 = vld [vmem:[#allocation5 + $0xd8] sm:$0xff]
    %v78 = vld [vmem:[#allocation5 + $0xe0] sm:$0xff]
    %v79 = vld [vmem:[#allocation5 + $0xe8] sm:$0xff]
    %v80 = vld [vmem:[#allocation5 + $0xf0] sm:$0xff]
    %v81 = vld [vmem:[#allocation5 + $0xf8] sm:$0xff]
    %82 = vmatprep.subr.mxu0 0.0
    %83 = vmatpush1.msra.mxu0 %v50
    %84 = vmatprep.subr.mxu0 0.0
    %85 = vmatpush1.msra.mxu0 %v51
    %86 = vmatprep.subr.mxu0 0.0
    %87 = vmatpush1.msra.mxu0 %v52
    %88 = vmatprep.subr.mxu0 0.0
    %89 = vmatpush1.msra.mxu0 %v53
    %90 = vmatprep.subr.mxu0 0.0
    %91 = vmatpush1.msra.mxu0 %v54
    %92 = vmatprep.subr.mxu0 0.0
    %93 = vmatpush1.msra.mxu0 %v55
    %94 = vmatprep.subr.mxu0 0.0
    %95 = vmatpush1.msra.mxu0 %v56
    %96 = vmatprep.subr.mxu0 0.0
    %97 = vmatpush1.msra.mxu0 %v57
    %98 = vmatprep.subr.mxu0 0.0
    %99 = vmatpush1.msra.mxu0 %v58
    %100 = vmatprep.subr.mxu0 0.0
    %101 = vmatpush1.msra.mxu0 %v59
    %102 = vmatprep.subr.mxu0 0.0
    %103 = vmatpush1.msra.mxu0 %v60
    %104 = vmatprep.subr.mxu0 0.0
    %105 = vmatpush1.msra.mxu0 %v61
    %106 = vmatprep.subr.mxu0 0.0
    %107 = vmatpush1.msra.mxu0 %v62
    %108 = vmatprep.subr.mxu0 0.0
    %109 = vmatpush1.msra.mxu0 %v63
    %110 = vmatprep.subr.mxu0 0.0
    %111 = vmatpush1.msra.mxu0 %v64
    %112 = vmatprep.subr.mxu0 0.0
    %113 = vmatpush1.msra.mxu0 %v65
    %114 = vmatprep.subr.mxu0 0.0
    %115 = vmatpush1.msra.mxu0 %v66
    %116 = vmatprep.subr.mxu0 0.0
    %117 = vmatpush1.msra.mxu0 %v67
    %118 = vmatprep.subr.mxu0 0.0
    %119 = vmatpush1.msra.mxu0 %v68
    %120 = vmatprep.subr.mxu0 0.0
    %121 = vmatpush1.msra.mxu0 %v69
    %122 = vmatprep.subr.mxu0 0.0
    %123 = vmatpush1.msra.mxu0 %v70
    %124 = vmatprep.subr.mxu0 0.0
    %125 = vmatpush1.msra.mxu0 %v71
    %126 = vmatprep.subr.mxu0 0.0
    %127 = vmatpush1.msra.mxu0 %v72
    %128 = vmatprep.subr.mxu0 0.0
    %129 = vmatpush1.msra.mxu0 %v73
    %130 = vmatprep.subr.mxu0 0.0
    %131 = vmatpush1.msra.mxu0 %v74
    %132 = vmatprep.subr.mxu0 0.0
    %133 = vmatpush1.msra.mxu0 %v75
    %134 = vmatprep.subr.mxu0 0.0
    %135 = vmatpush1.msra.mxu0 %v76
    %136 = vmatprep.subr.mxu0 0.0
    %137 = vmatpush1.msra.mxu0 %v77
    %138 = vmatprep.subr.mxu0 0.0
    %139 = vmatpush1.msra.mxu0 %v78
    %140 = vmatprep.subr.mxu0 0.0
    %141 = vmatpush1.msra.mxu0 %v79
    %142 = vmatprep.subr.mxu0 0.0
    %143 = vmatpush1.msra.mxu0 %v80
    %144 = vmatprep.subr.mxu0 0.0
    %145 = vmatpush1.msra.mxu0 %v81
    %146 = vmatprep.mubr.f32.mxu0 %v42
    %147 = vmatmul.mubr.f32.gmra.mrb[0].mxu0 %v41
    %v148 = vpop.f32.mrb[0].mxu0
    %v149 = vadd.f32 0.0, %v148
    %v150 = vpop.f32.mrb[0].mxu0
    %151 = vdwg.mxu0
    %v152 = vmul.f32 %v149, %v49
    %v153 = vld [vmem:[%s2] sm:$0x1]
    %v155 = vlaneseq
    %v156 = vshrl.u32 %v155, 7
    %v157 = vsub.s32 0, %v156
    %v158 = vrot.slane %v153, %v157
    %v160 = vadd.f32 %v152, %v158
    %161 = vst [vmem:[#allocation7] sm:$0xff] %v160
    // Predicated region
    $region22: #{tpu_custom_call.1} parent=1 // pred_check
      _
    $region23: #{tpu_custom_call.1} parent=1 // pred_check_branch
      %163 = sbr.rel (0) target = $region25
    $region24: #{tpu_custom_call.1} parent=1 // pred_region
      %s165 = ssub.s32 128, 128
      %166 = vsyncadd [#allocation4], %s165
      %s168 = sshll.u32 [#allocation7], 4
      %s169 = int_to_ptr.vmem [resolvable:$true] %s168
      %171 = dma.vmem_to_hbm [thread:$0]  %s169, 128, %s3, [#allocation4]
    $region25: #{tpu_custom_call.1} parent=1 // pred_fallthru
      _
    // Predicated region
    $region26: #{tpu_custom_call.1} parent=1 // pred_check
      _
    $region27: #{tpu_custom_call.1} parent=1 // pred_check_branch
      %173 = sbr.rel (0) target = $region29
    $region28: #{tpu_custom_call.1} parent=1 // pred_region
      %174 = dma.done [#allocation4], 128
    $region29: #{tpu_custom_call.1} parent=1 // pred_fallthru
      _
    %175 = vsyncpa [#allocation3], 1
    %176 = vsyncpa [#allocation6], 1
    %177 = vsyncpa [#allocation4], 1

</llo_original>
